<compile_context>
chip_gen: v7x
topology: tpu7x:2x2x1
jax: 0.10.0
libtpu: 0.0.40
codegen_flags: <defaults>
</compile_context>

<pallas_src>
import jax
import jax.numpy as jnp
from jax.experimental import pallas as pl
from jax.experimental.pallas import tpu as pltpu


_BN_EPS = 1e-5


def residual_block_kernel(x_ref, w_ref, bn_ref, o_ref, h1_ref):
    """One (phase, feature-tile) grid step.

    x_ref : (N, Dp)  f32   activations, resident across the whole grid
    w_ref : (Dp, tn) bf16  column slab of W1 (phase 0) or W2 (phase 1)
    bn_ref: (4, tn)  f32   rows = [bn1.w, bn1.b, bn2.w, bn2.b] for this tile
    o_ref : (N, tn)  f32   output column tile (written only in phase 1)
    h1_ref: (N, Dp)  bf16  scratch: relu(bn1(fc1(x))), filled during phase 0
    """
    eps = jnp.float32(_BN_EPS)
    phase = pl.program_id(0)
    tn = o_ref.shape[1]
    col = pl.multiple_of(pl.program_id(1) * tn, 128)

    def bn_train(h, g, beta):
        # Training-mode batch stats; centered two-pass variance (no E[h^2]-mu^2
        # cancellation).  rsqrt lands on the EUP slot.
        mu = jnp.mean(h, axis=0, keepdims=True)
        c = h - mu
        var = jnp.mean(c * c, axis=0, keepdims=True)
        return c * (g * jax.lax.rsqrt(var + eps)) + beta

    @pl.when(phase == 0)
    def _fc1_bn1_relu():
        # fc1 column slab (MXU, bf16 in / f32 accumulate).  Linear bias is
        # omitted: training-mode BN's mean subtraction cancels it exactly.
        h = jnp.dot(x_ref[...].astype(w_ref.dtype), w_ref[...],
                    preferred_element_type=jnp.float32)
        h = jnp.maximum(bn_train(h, bn_ref[0:1, :], bn_ref[1:2, :]), 0.0)
        h1_ref[:, pl.ds(col, tn)] = h.astype(h1_ref.dtype)

    @pl.when(phase == 1)
    def _fc2_bn2_residual_relu():
        # fc2 column slab: full contraction over h1 (already bf16 in scratch).
        h = jnp.dot(h1_ref[...], w_ref[...],
                    preferred_element_type=jnp.float32)
        h = bn_train(h, bn_ref[2:3, :], bn_ref[3:4, :])
        res = x_ref[:, pl.ds(col, tn)]
        o_ref[...] = jnp.maximum(h + res, 0.0).astype(o_ref.dtype)


def _pad_axis(a, axis, target):
    if a.shape[axis] == target:
        return a
    pad = [(0, 0)] * a.ndim
    pad[axis] = (0, target - a.shape[axis])
    return jnp.pad(a, pad)


def _round_up(n, m):
    return ((n + m - 1) // m) * m


def prepare_params(params, *, mxu_dtype=jnp.bfloat16, max_tile=512):
    """One-time (init-time) weight prep.

    Pads the feature dim to a lane/MXU-aligned Dp, stacks W1/W2 into a single
    (2, Dp, Dp) bf16 operand, and packs the four BN vectors into (4, Dp).
    Doing this once keeps the ~3x-weight-DMA pad+cast pass out of the hot path.
    """
    D = params["w1"].shape[0]
    Dp = max(128, _round_up(D, 128))
    # Feature-column tile: largest multiple of 128 (<= max_tile) dividing Dp.
    tn = 128
    for cand in (512, 384, 256, 128):
        if cand <= max_tile and Dp % cand == 0:
            tn = cand
            break
    w1 = _pad_axis(_pad_axis(params["w1"], 0, Dp), 1, Dp)
    w2 = _pad_axis(_pad_axis(params["w2"], 0, Dp), 1, Dp)
    w = jnp.stack([w1, w2]).astype(mxu_dtype)                      # (2, Dp, Dp)
    bn = _pad_axis(jnp.stack([params["g1"], params["beta1"],
                              params["g2"], params["beta2"]]), 1, Dp
                   ).astype(jnp.float32)                           # (4, Dp)
    return {"w": w, "bn": bn, "D": D, "Dp": Dp, "tn": tn}


def residual_block(x, prep):
    """x: (N, D) float32.  prep: output of prepare_params."""
    N, D = x.shape
    assert D == prep["D"], "prepare_params was built for a different input_dim"
    Dp, tn = prep["Dp"], prep["tn"]
    n_tiles = Dp // tn
    w, bn = prep["w"], prep["bn"]

    xp = _pad_axis(x.astype(jnp.float32), 1, Dp)   # cheap: N*D, not Dp^2

    # Per-step VMEM: only the pipelined operands (weight slab, bn tile, output
    # tile) are double-buffered; x keeps a constant block index (fetched once)
    # and h1 is scratch.  Leave headroom and stay under v7x's 64 MiB/TC.
    footprint = (2 * N * Dp * 4                      # x (conservative 2 bufs)
                 + N * Dp * 2                        # h1 scratch (bf16)
                 + 2 * Dp * tn * w.dtype.itemsize    # weight slab, 2 bufs
                 + 2 * 4 * tn * 4                    # bn tile, 2 bufs
                 + 2 * N * tn * 4)                   # out tile, 2 bufs
    vmem_limit = int(min(max(footprint + (4 << 20), 16 << 20), 56 << 20))

    flops = 4 * N * Dp * Dp                          # two (N,Dp)@(Dp,Dp) matmuls
    bytes_accessed = int(w.size * w.dtype.itemsize + bn.size * 4
                         + 2 * N * Dp * 4)           # weights + bn + x + out
    cost = pl.CostEstimate(flops=flops, transcendentals=2 * Dp,
                           bytes_accessed=bytes_accessed)

    grid_spec = pltpu.PrefetchScalarGridSpec(
        num_scalar_prefetch=0,
        grid=(2, n_tiles),                           # (phase, feature tile)
        in_specs=[
            # x: constant block index -> DMA'd once, resident across the grid.
            pl.BlockSpec((N, Dp), lambda p, j: (0, 0)),
            # Stacked weights: phase selects W1/W2, j selects the column slab.
            # This is the streamed / double-buffered operand.
            pl.BlockSpec((None, Dp, tn), lambda p, j: (p, 0, j)),
            # Packed BN vectors, tiled along features.
            pl.BlockSpec((4, tn), lambda p, j: (0, j)),
        ],
        # Output index j*p: during phase 0 it stays (0, 0) so no block is ever
        # written back; each block (0, j) is then written exactly once in
        # phase 1 (contiguous runs, no revisits, no garbage writebacks).
        out_specs=pl.BlockSpec((N, tn), lambda p, j: (0, j * p)),
        scratch_shapes=[pltpu.VMEM((N, Dp), w.dtype)],   # h1 = relu(bn1(fc1(x)))
    )

    out = pl.pallas_call(
        residual_block_kernel,
        out_shape=jax.ShapeDtypeStruct((N, Dp), jnp.float32),
        grid_spec=grid_spec,
        compiler_params=pltpu.CompilerParams(
            # Phase axis is inherently sequential; the feature-tile axis reads
            # the full h1 scratch in phase 1, so it stays sequential too.
            dimension_semantics=("arbitrary", "arbitrary"),
            vmem_limit_bytes=vmem_limit),
        cost_estimate=cost,
    )(xp, w, bn)
    # TODO(synk): v7x megacore split (pl.core_map, each TC owning half the
    # feature tiles, exchanging its h1 half via VMEM_SHARED) and a two-phase
    # sum/sumsq BN restructure for batch (N) tiling once N*Dp outgrows VMEM.
    return out[:, :D]


def init_params(key, input_dim):
    """nn.Linear-style init.  PyTorch weight is (out, in); we store the
    transpose (in, out) so the kernel computes x @ W.  Linear biases are kept
    for the reference even though the kernel drops them (BN cancels them)."""
    k1, k2, k3, k4 = jax.random.split(key, 4)
    bound = 1.0 / float(input_dim) ** 0.5
    u = lambda k, shape: jax.random.uniform(k, shape, jnp.float32, -bound, bound)
    return {
        "w1": u(k1, (input_dim, input_dim)),            # fc1.weight.T
        "b1": u(k2, (input_dim,)),                      # fc1.bias (ref only)
        "g1": jnp.ones((input_dim,), jnp.float32),      # bn1.weight
        "beta1": jnp.zeros((input_dim,), jnp.float32),  # bn1.bias
        "w2": u(k3, (input_dim, input_dim)),            # fc2.weight.T
        "b2": u(k4, (input_dim,)),                      # fc2.bias (ref only)
        "g2": jnp.ones((input_dim,), jnp.float32),      # bn2.weight
        "beta2": jnp.zeros((input_dim,), jnp.float32),  # bn2.bias
    }


def _bn_train(h, g, b, eps=_BN_EPS):
    mu = jnp.mean(h, axis=0, keepdims=True)
    var = jnp.mean((h - mu) ** 2, axis=0, keepdims=True)
    return (h - mu) / jnp.sqrt(var + eps) * g + b


def residual_block_ref(x, p, mxu_dtype=None):
    """Pure-JAX reference of the PyTorch forward (training-mode BN, Linear
    biases included).  If mxu_dtype is given, matmul inputs are cast the same
    way as in the kernel for a tight numerical comparison."""
    cast = (lambda a: a.astype(mxu_dtype)) if mxu_dtype is not None else (lambda a: a)
    h = jnp.dot(cast(x), cast(p["w1"]), preferred_element_type=jnp.float32) + p["b1"]
    h = jnp.maximum(_bn_train(h, p["g1"], p["beta1"]), 0.0)
    h = jnp.dot(cast(h), cast(p["w2"]), preferred_element_type=jnp.float32) + p["b2"]
    h = _bn_train(h, p["g2"], p["beta2"])
    return jnp.maximum(h + x, 0.0)


if __name__ == "__main__":
    key = jax.random.PRNGKey(0)
    kx, kp, kx2, kp2 = jax.random.split(key, 4)

    # Small shape consistent with the module (word2vec MLP residual block).
    # NOTE: with tiny N the kernel is weight-bandwidth-bound; batch N>=128-256
    # is what it takes to actually use the MXU rows.
    batch, input_dim = 8, 32
    x = jax.random.normal(kx, (batch, input_dim), jnp.float32)
    params = init_params(kp, input_dim)
    prep = prepare_params(params)                    # one-time pad/stack/cast
    out = jax.block_until_ready(residual_block(x, prep))
    assert out.shape == (batch, input_dim)

    # Tight check vs. a reference that casts matmul inputs like the kernel
    # (also verifies the Linear-bias-cancellation claim: the reference keeps them).
    ref_m = residual_block_ref(x, params, mxu_dtype=jnp.bfloat16)
    assert jnp.allclose(out, ref_m, atol=5e-3, rtol=5e-3), float(
        jnp.max(jnp.abs(out - ref_m)))
    # Looser check vs. the exact f32 PyTorch-semantics forward (bf16 MXU noise).
    ref_f = residual_block_ref(x, params)
    assert jnp.allclose(out, ref_f, atol=5e-2, rtol=5e-2), float(
        jnp.max(jnp.abs(out - ref_f)))

    # Second shape: exercises feature padding (200 -> 256) and a multi-tile
    # grid (tn forced to 128 -> 2 feature tiles per phase).
    batch2, dim2 = 16, 200
    x2 = jax.random.normal(kx2, (batch2, dim2), jnp.float32)
    params2 = init_params(kp2, dim2)
    prep2 = prepare_params(params2, max_tile=128)
    out2 = jax.block_until_ready(residual_block(x2, prep2))
    assert out2.shape == (batch2, dim2)
    ref2 = residual_block_ref(x2, params2, mxu_dtype=jnp.bfloat16)
    assert jnp.allclose(out2, ref2, atol=5e-3, rtol=5e-3), float(
        jnp.max(jnp.abs(out2 - ref2)))

    print("KERNEL_OK")
</pallas_src>

<mosaic_0001>
module attributes {stable_mosaic.version = 11 : i64} {
  func.func @residual_block_kernel(%arg0: i32, %arg1: i32, %arg2: memref<8x128xf32, #tpu.memory_space<vmem>>, %arg3: memref<1x128x128xbf16, #tpu.memory_space<vmem>>, %arg4: memref<4x128xf32, #tpu.memory_space<vmem>>, %arg5: memref<8x128xf32, #tpu.memory_space<vmem>>, %arg6: memref<8x128xbf16, #tpu.memory_space<vmem>>) attributes {dimension_semantics = [#tpu.dimension_semantics<arbitrary>, #tpu.dimension_semantics<arbitrary>], iteration_bounds = array<i64: 2, 1>, scalar_prefetch = 0 : i64, scratch_operands = 1 : i64, tpu.core_type = #tpu.core_type<tc>, window_params = [{pipeline_mode = #tpu.pipeline_mode<synchronous>, transform_indices = @transform_0, window_bounds = array<i64: 8, 128>}, {transform_indices = @transform_1, window_bounds = array<i64: 1, 128, 128>}, {transform_indices = @transform_2, window_bounds = array<i64: 4, 128>}, {transform_indices = @transform_3, window_bounds = array<i64: 8, 128>}]} {
    %c128_i32 = arith.constant 128 : i32
    %0 = arith.muli %arg1, %c128_i32 : i32
    %1 = tpu.assume_multiple %0, 128 : i32
    %c0_i32 = arith.constant 0 : i32
    %2 = arith.cmpi eq, %arg0, %c0_i32 : i32
    %3 = arith.extui %2 : i1 to i32
    %cst = arith.constant 9.99999974E-6 : f32
    %c0_i32_0 = arith.constant 0 : i32
    %4 = arith.cmpi ne, %3, %c0_i32_0 : i32
    scf.if %4 {
      %c0 = arith.constant 0 : index
      %c0_3 = arith.constant 0 : index
      %8 = vector.load %arg2[%c0, %c0_3] : memref<8x128xf32, #tpu.memory_space<vmem>>, vector<8x128xf32>
      %9 = arith.truncf %8 : vector<8x128xf32> to vector<8x128xbf16>
      %c0_4 = arith.constant 0 : index
      %c0_5 = arith.constant 0 : index
      %c0_6 = arith.constant 0 : index
      %10 = vector.load %arg3[%c0_4, %c0_5, %c0_6] : memref<1x128x128xbf16, #tpu.memory_space<vmem>>, vector<1x128x128xbf16>
      %11 = vector.shape_cast %10 : vector<1x128x128xbf16> to vector<128x128xbf16>
      %cst_7 = arith.constant dense<0.000000e+00> : vector<8x128xf32>
      %12 = tpu.matmul %9, %11, %cst_7 {dimension_numbers = #tpu.dot_dimension_numbers<[1], [0], [0], [1], [0, 0, 1, 1], [], []>} : vector<8x128xbf16>, vector<128x128xbf16>, vector<8x128xf32> -> vector<8x128xf32>
      %c0_8 = arith.constant 0 : index
      %c0_9 = arith.constant 0 : index
      %13 = vector.load %arg4[%c0_8, %c0_9] : memref<4x128xf32, #tpu.memory_space<vmem>>, vector<1x128xf32>
      %c1 = arith.constant 1 : index
      %c0_10 = arith.constant 0 : index
      %14 = vector.load %arg4[%c1, %c0_10] : memref<4x128xf32, #tpu.memory_space<vmem>>, vector<1x128xf32>
      %cst_11 = arith.constant dense<0.000000e+00> : vector<128xf32>
      %15 = vector.multi_reduction <add>, %12, %cst_11 [0] : vector<8x128xf32> to vector<128xf32>
      %16 = vector.shape_cast %15 : vector<128xf32> to vector<1x128xf32>
      %cst_12 = arith.constant 8.000000e+00 : f32
      %17 = vector.broadcast %cst_12 : f32 to vector<1x128xf32>
      %18 = arith.divf %16, %17 : vector<1x128xf32>
      %19 = vector.broadcast %18 : vector<1x128xf32> to vector<8x128xf32>
      %20 = arith.subf %12, %19 : vector<8x128xf32>
      %21 = arith.mulf %20, %20 : vector<8x128xf32>
      %cst_13 = arith.constant dense<0.000000e+00> : vector<128xf32>
      %22 = vector.multi_reduction <add>, %21, %cst_13 [0] : vector<8x128xf32> to vector<128xf32>
      %23 = vector.shape_cast %22 : vector<128xf32> to vector<1x128xf32>
      %cst_14 = arith.constant 8.000000e+00 : f32
      %24 = vector.broadcast %cst_14 : f32 to vector<1x128xf32>
      %25 = arith.divf %23, %24 : vector<1x128xf32>
      %26 = vector.broadcast %cst : f32 to vector<1x128xf32>
      %27 = arith.addf %25, %26 : vector<1x128xf32>
      %28 = math.rsqrt %27 : vector<1x128xf32>
      %29 = arith.mulf %13, %28 : vector<1x128xf32>
      %30 = vector.broadcast %29 : vector<1x128xf32> to vector<8x128xf32>
      %31 = arith.mulf %20, %30 : vector<8x128xf32>
      %32 = vector.broadcast %14 : vector<1x128xf32> to vector<8x128xf32>
      %33 = arith.addf %31, %32 : vector<8x128xf32>
      %cst_15 = arith.constant 0.000000e+00 : f32
      %34 = vector.broadcast %cst_15 : f32 to vector<8x128xf32>
      %35 = arith.maximumf %33, %34 : vector<8x128xf32>
      %36 = arith.truncf %35 : vector<8x128xf32> to vector<8x128xbf16>
      %c0_16 = arith.constant 0 : index
      %37 = arith.index_cast %1 : i32 to index
      %38 = vector.load %arg6[%c0_16, %37] : memref<8x128xbf16, #tpu.memory_space<vmem>>, vector<8x128xbf16>
      tpu.vector_store %arg6[%c0_16, %37], %36 {strides = array<i32>} : memref<8x128xbf16, #tpu.memory_space<vmem>>, vector<8x128xbf16>,
    } else {
    }
    %c1_i32 = arith.constant 1 : i32
    %5 = arith.cmpi eq, %arg0, %c1_i32 : i32
    %6 = arith.extui %5 : i1 to i32
    %cst_1 = arith.constant 9.99999974E-6 : f32
    %c0_i32_2 = arith.constant 0 : i32
    %7 = arith.cmpi ne, %6, %c0_i32_2 : i32
    scf.if %7 {
      %c0 = arith.constant 0 : index
      %c0_3 = arith.constant 0 : index
      %8 = vector.load %arg6[%c0, %c0_3] : memref<8x128xbf16, #tpu.memory_space<vmem>>, vector<8x128xbf16>
      %c0_4 = arith.constant 0 : index
      %c0_5 = arith.constant 0 : index
      %c0_6 = arith.constant 0 : index
      %9 = vector.load %arg3[%c0_4, %c0_5, %c0_6] : memref<1x128x128xbf16, #tpu.memory_space<vmem>>, vector<1x128x128xbf16>
      %10 = vector.shape_cast %9 : vector<1x128x128xbf16> to vector<128x128xbf16>
      %cst_7 = arith.constant dense<0.000000e+00> : vector<8x128xf32>
      %11 = tpu.matmul %8, %10, %cst_7 {dimension_numbers = #tpu.dot_dimension_numbers<[1], [0], [0], [1], [0, 0, 1, 1], [], []>} : vector<8x128xbf16>, vector<128x128xbf16>, vector<8x128xf32> -> vector<8x128xf32>
      %c2 = arith.constant 2 : index
      %c0_8 = arith.constant 0 : index
      %12 = vector.load %arg4[%c2, %c0_8] : memref<4x128xf32, #tpu.memory_space<vmem>>, vector<1x128xf32>
      %c3 = arith.constant 3 : index
      %c0_9 = arith.constant 0 : index
      %13 = vector.load %arg4[%c3, %c0_9] : memref<4x128xf32, #tpu.memory_space<vmem>>, vector<1x128xf32>
      %cst_10 = arith.constant dense<0.000000e+00> : vector<128xf32>
      %14 = vector.multi_reduction <add>, %11, %cst_10 [0] : vector<8x128xf32> to vector<128xf32>
      %15 = vector.shape_cast %14 : vector<128xf32> to vector<1x128xf32>
      %cst_11 = arith.constant 8.000000e+00 : f32
      %16 = vector.broadcast %cst_11 : f32 to vector<1x128xf32>
      %17 = arith.divf %15, %16 : vector<1x128xf32>
      %18 = vector.broadcast %17 : vector<1x128xf32> to vector<8x128xf32>
      %19 = arith.subf %11, %18 : vector<8x128xf32>
      %20 = arith.mulf %19, %19 : vector<8x128xf32>
      %cst_12 = arith.constant dense<0.000000e+00> : vector<128xf32>
      %21 = vector.multi_reduction <add>, %20, %cst_12 [0] : vector<8x128xf32> to vector<128xf32>
      %22 = vector.shape_cast %21 : vector<128xf32> to vector<1x128xf32>
      %cst_13 = arith.constant 8.000000e+00 : f32
      %23 = vector.broadcast %cst_13 : f32 to vector<1x128xf32>
      %24 = arith.divf %22, %23 : vector<1x128xf32>
      %25 = vector.broadcast %cst_1 : f32 to vector<1x128xf32>
      %26 = arith.addf %24, %25 : vector<1x128xf32>
      %27 = math.rsqrt %26 : vector<1x128xf32>
      %28 = arith.mulf %12, %27 : vector<1x128xf32>
      %29 = vector.broadcast %28 : vector<1x128xf32> to vector<8x128xf32>
      %30 = arith.mulf %19, %29 : vector<8x128xf32>
      %31 = vector.broadcast %13 : vector<1x128xf32> to vector<8x128xf32>
      %32 = arith.addf %30, %31 : vector<8x128xf32>
      %c0_14 = arith.constant 0 : index
      %33 = arith.index_cast %1 : i32 to index
      %34 = vector.load %arg2[%c0_14, %33] : memref<8x128xf32, #tpu.memory_space<vmem>>, vector<8x128xf32>
      %35 = arith.addf %32, %34 : vector<8x128xf32>
      %cst_15 = arith.constant 0.000000e+00 : f32
      %36 = vector.broadcast %cst_15 : f32 to vector<8x128xf32>
      %37 = arith.maximumf %35, %36 : vector<8x128xf32>
      %c0_16 = arith.constant 0 : index
      %c0_17 = arith.constant 0 : index
      %38 = vector.load %arg5[%c0_16, %c0_17] : memref<8x128xf32, #tpu.memory_space<vmem>>, vector<8x128xf32>
      tpu.vector_store %arg5[%c0_16, %c0_17], %37 {strides = array<i32>} : memref<8x128xf32, #tpu.memory_space<vmem>>, vector<8x128xf32>,
    } else {
    }
    return
  }
  func.func @transform_0(%arg0: i32, %arg1: i32) -> (i32, i32) {
    %c0_i32 = arith.constant 0 : i32
    %c0_i32_0 = arith.constant 0 : i32
    %c0_i32_1 = arith.constant 0 : i32
    return %c0_i32, %c0_i32_0 : i32, i32
  }
  func.func @transform_1(%arg0: i32, %arg1: i32) -> (i32, i32, i32) {
    %c0_i32 = arith.constant 0 : i32
    %c0_i32_0 = arith.constant 0 : i32
    return %arg0, %c0_i32, %arg1 : i32, i32, i32
  }
  func.func @transform_2(%arg0: i32, %arg1: i32) -> (i32, i32) {
    %c0_i32 = arith.constant 0 : i32
    %c0_i32_0 = arith.constant 0 : i32
    return %c0_i32, %arg1 : i32, i32
  }
  func.func @transform_3(%arg0: i32, %arg1: i32) -> (i32, i32) {
    %0 = arith.muli %arg1, %arg0 : i32
    %c0_i32 = arith.constant 0 : i32
    %c0_i32_0 = arith.constant 0 : i32
    return %c0_i32, %0 : i32, i32
  }
}

</mosaic_0001>

<llo_original>
// kernel: tpu_custom_call.1
$region0: #{tpu_custom_call.1}
  #allocation0 [shape = 'u32[]', space=smem, size = 0x4, offset = 0x4, fixed_abs, tag = 'smem constant byte address 0x4 - core index']
  #allocation1 [shape = 'u32[144,128]{1,0:T(1,128)}', space=vmem, size = 0x12000, scoped, tag = 'internal scratch']
  #allocation2 [shape = 'bf16[8,128]{1,0:T(8,128)(2,1)}', space=vmem, size = 0x800, scoped, tag = 'scratch operand']
  %s0 = inlined_call_operand.hbm [shape: f32[8,128], index: 0, kind: input, shape index: {}]
  %s1 = inlined_call_operand.hbm [shape: bf16[2,128,128], index: 1, kind: input, shape index: {}]
  %s2 = inlined_call_operand.vmem [shape: f32[4,128], index: 2, kind: input, shape index: {}]
  %s3 = inlined_call_operand.hbm [shape: f32[8,128], index: 3, kind: output, shape index: {}]
  %s4 = sld [smem:[#allocation0]]
  $region61: #{tpu_custom_call.1} parent=0
    _
  %s6 = ssub.s32 1, %s4
  %s7 = scalar_select 0, %s6, %s4
  $region1: #{tpu_custom_call.1} parent=0
    #allocation3 [shape = 'u8[4096]{0}', space=vmem, size = 0x1000, scoped, tag = 'input window, operand 0, single buffered']
    #allocation4 [shape = 's32[2]{0}', space=sflag, size = 0x8, scoped, tag = 'scoped memory for tpu_custom_call.1']
    #allocation5 [shape = 's32[2]{0}', space=sflag, size = 0x8, scoped, tag = 'scoped memory for tpu_custom_call.1']
    #allocation6 [shape = 'u8[65536]{0}', space=vmem, size = 0x10000, scoped, tag = 'input window, operand 1']
    #allocation7 [shape = 's32[2]{0}', space=sflag, size = 0x8, scoped, tag = 'scoped memory for tpu_custom_call.1']
    #allocation8 [shape = 'u8[8192]{0}', space=vmem, size = 0x2000, scoped, tag = 'output window, operand 0']
    %8 = vsyncpa [#allocation4], 0
    %9 = vsyncpa [#allocation7], 0
    %s10 = scalar_lea.sflag [#allocation7], 1
    %11 = vsyncpa %s10, 0
    %12 = vsyncpa [#allocation5], 0
    %s13 = scalar_lea.sflag [#allocation5], 1
    %14 = vsyncpa %s13, 0
    loop: start=0, step=1, limit=4
    $region2: #{tpu_custom_call.1} parent=1 // loop_pre_header
      _
    $region3: #{tpu_custom_call.1} parent=1 // loop_header
      %s16 = sphi 0, %s20
      %p17 = scmp.ge.s32.totalorder %s16, 4
      %s23 = sphi 0, %s35
      %s24 = sphi 0, %s31
      %s25 = sphi 0, %s23
      %s26 = sphi 0, %s24
      %s27 = sphi 0, %s25
      %s28 = sphi 0, %s26
      %s36 = sphi 0, %s36
      %s38 = sphi 0, %s36
      %s39 = sphi 0, %s38
      %s53 = sphi 0, %s39
      %s61 = sphi 0, %s63
      %s64 = sphi 0, %s61
      %s65 = sphi 0, %s64
      %s81 = sphi 0, %s65
      %s87 = sphi 0, %s89
      %s90 = sphi 0, %s87
      %s91 = sphi 0, %s90
      %s107 = sphi 0, %s91
      %s115 = sphi 0, %s117
      %s118 = sphi 0, %s115
      %s119 = sphi 0, %s118
      %s135 = sphi 0, %s119
    $region4: #{tpu_custom_call.1} parent=1 // loop_header_branch
      %19 = sbr.rel (%p17) target = $region8
    $region5: #{tpu_custom_call.1} parent=1 // loop_body
      %s21 = ssub.s32 %s16, 1
      %s22 = ssub.s32 %s16, 2
      %s29 = sadd.s32 1, %s24
      %p30 = scmp.ge.s32.totalorder %s29, 1
      %s31 = scalar_select %p30, 0, %s29
      %s32 = sadd.s32 1, %s23
      %s33 = scalar_select %p30, %s32, %s23
      %p34 = scmp.ge.s32.totalorder %s33, 2
      %s35 = scalar_select %p34, 0, %s33
      %s37 = sadd.s32 %s36, 1
      %p40 = scmp.eq.s32.totalorder %s16, 1
      %p41 = scmp.ne.s32.totalorder %s36, %s38
      %p42 = scmp.eq.s32.totalorder %s16, 0
      %p43 = por %p41, %p42
      %p44 = scmp.ne.s32.totalorder %s36, %s38
      %p45 = scmp.eq.s32.totalorder %s21, 1
      %p46 = por %p44, %p45
      %p47 = scmp.ne.s32.totalorder %s38, %s39
      %p48 = scmp.eq.s32.totalorder %s21, 0
      %p49 = por %p47, %p48
      %p50 = scmp.ne.s32.totalorder %s38, %s39
      %p51 = scmp.eq.s32.totalorder %s22, 1
      %p52 = por %p50, %p51
      %p54 = scmp.ne.s32.totalorder %s39, %s53
      %p55 = scmp.eq.s32.totalorder %s22, 0
      %p56 = por %p54, %p55
      %s57 = ssub.s32 %s23, %s35
      %s58 = ssub.s32 %s24, %s31
      %s59 = sor.u32 %s57, %s58
      %p60 = scmp.eq.s32.totalorder %s59, 0
      %s62 = sadd.s32 %s61, 1
      %s63 = scalar_select %p60, %s61, %s62
      %p66 = pneg %p60
      %p67 = scmp.eq.s32.totalorder %s16, 1
      %p68 = por %p66, %p67
      %p69 = scmp.ne.s32.totalorder %s61, %s64
      %p70 = scmp.eq.s32.totalorder %s16, 0
      %p71 = por %p69, %p70
      %p72 = scmp.ne.s32.totalorder %s61, %s64
      %p73 = scmp.eq.s32.totalorder %s21, 1
      %p74 = por %p72, %p73
      %p75 = scmp.ne.s32.totalorder %s64, %s65
      %p76 = scmp.eq.s32.totalorder %s21, 0
      %p77 = por %p75, %p76
      %p78 = scmp.ne.s32.totalorder %s64, %s65
      %p79 = scmp.eq.s32.totalorder %s22, 1
      %p80 = por %p78, %p79
      %p82 = scmp.ne.s32.totalorder %s65, %s81
      %p83 = scmp.eq.s32.totalorder %s22, 0
      %p84 = por %p82, %p83
      %s85 = ssub.s32 %s24, %s31
      %p86 = scmp.eq.s32.totalorder %s85, 0
      %s88 = sadd.s32 %s87, 1
      %s89 = scalar_select %p86, %s87, %s88
      %p92 = pneg %p86
      %p93 = scmp.eq.s32.totalorder %s16, 1
      %p94 = por %p92, %p93
      %p95 = scmp.ne.s32.totalorder %s87, %s90
      %p96 = scmp.eq.s32.totalorder %s16, 0
      %p97 = por %p95, %p96
      %p98 = scmp.ne.s32.totalorder %s87, %s90
      %p99 = scmp.eq.s32.totalorder %s21, 1
      %p100 = por %p98, %p99
      %p101 = scmp.ne.s32.totalorder %s90, %s91
      %p102 = scmp.eq.s32.totalorder %s21, 0
      %p103 = por %p101, %p102
      %p104 = scmp.ne.s32.totalorder %s90, %s91
      %p105 = scmp.eq.s32.totalorder %s22, 1
      %p106 = por %p104, %p105
      %p108 = scmp.ne.s32.totalorder %s91, %s107
      %p109 = scmp.eq.s32.totalorder %s22, 0
      %p110 = por %p108, %p109
      %s111 = smul.u32 %s24, %s23
      %s112 = smul.u32 %s31, %s35
      %s113 = ssub.s32 %s111, %s112
      %p114 = scmp.eq.s32.totalorder %s113, 0
      %s116 = sadd.s32 %s115, 1
      %s117 = scalar_select %p114, %s115, %s116
      %p120 = pneg %p114
      %p121 = scmp.eq.s32.totalorder %s16, 1
      %p122 = por %p120, %p121
      %p123 = scmp.ne.s32.totalorder %s115, %s118
      %p124 = scmp.eq.s32.totalorder %s16, 0
      %p125 = por %p123, %p124
      %p126 = scmp.ne.s32.totalorder %s115, %s118
      %p127 = scmp.eq.s32.totalorder %s21, 1
      %p128 = por %p126, %p127
      %p129 = scmp.ne.s32.totalorder %s118, %s119
      %p130 = scmp.eq.s32.totalorder %s21, 0
      %p131 = por %p129, %p130
      %p132 = scmp.ne.s32.totalorder %s118, %s119
      %p133 = scmp.eq.s32.totalorder %s22, 1
      %p134 = por %p132, %p133
      %p136 = scmp.ne.s32.totalorder %s119, %s135
      %p137 = scmp.eq.s32.totalorder %s22, 0
      %p138 = por %p136, %p137
      %p139 = scmp.le.s32.totalorder 1, %s16
      %p140 = scmp.lt.s32.totalorder %s16, 3
      %p141 = pnand %p139, %p140
      %p142 = pneg %p141
      // Predicated region
      $region9: #{tpu_custom_call.1} parent=5 // pred_check
        _
      $region10: #{tpu_custom_call.1} parent=5 // pred_check_branch
        %144 = sbr.rel (%p141) target = $region12
      $region11: #{tpu_custom_call.1} parent=5 // pred_region
        %s145 = ssub.s32 %s16, 1
        // Predicated region
        $region13: #{tpu_custom_call.1} parent=11 // pred_check
          %p146 = pneg %p49
        $region14: #{tpu_custom_call.1} parent=11 // pred_check_branch
          %148 = sbr.rel (%p146) target = $region16
        $region15: #{tpu_custom_call.1} parent=11 // pred_region
          %s150 = ssub.s32 128, 128
          %151 = vsyncadd [#allocation4], %s150
          %s153 = sshll.u32 [#allocation3], 4
          %s154 = int_to_ptr.vmem [resolvable:$true] %s153
          %156 = dma.hbm_to_vmem [thread:$0]  %s0, 128, %s154, [#allocation4]
        $region16: #{tpu_custom_call.1} parent=11 // pred_fallthru
          _
        // Predicated region
        $region17: #{tpu_custom_call.1} parent=11 // pred_check
          %p157 = pneg %p103
        $region18: #{tpu_custom_call.1} parent=11 // pred_check_branch
          %159 = sbr.rel (%p157) target = $region20
        $region19: #{tpu_custom_call.1} parent=11 // pred_region
          %p160 = scmp.lt.s32.totalorder %s26, 0
          %s161 = scalar_select %p160, %s26, 0
          %s162 = smul.addr %s161, 4
          %s163 = scalar_lea.vmem %s2, %s162
        $region20: #{tpu_custom_call.1} parent=11 // pred_fallthru
          _
      $region12: #{tpu_custom_call.1} parent=5 // pred_fallthru
        _
      %p164 = scmp.lt.s32.totalorder %s16, 2
      // Predicated region
      $region21: #{tpu_custom_call.1} parent=5 // pred_check
        %p165 = pneg %p164
      $region22: #{tpu_custom_call.1} parent=5 // pred_check_branch
        %167 = sbr.rel (%p165) target = $region24
      $region23: #{tpu_custom_call.1} parent=5 // pred_region
        // Predicated region
        $region25: #{tpu_custom_call.1} parent=23 // pred_check
          %p168 = pneg %p71
        $region26: #{tpu_custom_call.1} parent=23 // pred_check_branch
          %170 = sbr.rel (%p168) target = $region28
        $region27: #{tpu_custom_call.1} parent=23 // pred_region
          %s171 = sand.u32 %s61, 1
          %s172 = scalar_lea.sflag [#allocation7], %s171
          %s173 = sand.u32 %s61, 1
          %s174 = smul.addr %s173, 64
          %s175 = scalar_lea.vmem [#allocation6], %s174
          %s177 = ssub.s32 1024, 1024
          %178 = vsyncadd %s172, %s177
          %s179 = smul.addr %s23, 16
          %s180 = sadd.s32 %s24, %s179
          %s181 = smul.addr %s180, 64
          %s182 = scalar_lea.hbm %s1, %s181
          %s183 = sshll.u32 %s175, 4
          %s184 = int_to_ptr.vmem [resolvable:$true] %s183
          %189 = dma.hbm_to_vmem [thread:$0]  %s182, 1024, %s184, %s172, 64, 64, 4
        $region28: #{tpu_custom_call.1} parent=23 // pred_fallthru
          _
      $region24: #{tpu_custom_call.1} parent=5 // pred_fallthru
        _
      %p190 = scmp.le.s32.totalorder 1, %s16
      %p191 = scmp.lt.s32.totalorder %s16, 3
      %p192 = pnand %p190, %p191
      %p193 = pneg %p192
      // Predicated region
      $region29: #{tpu_custom_call.1} parent=5 // pred_check
        _
      $region30: #{tpu_custom_call.1} parent=5 // pred_check_branch
        %195 = sbr.rel (%p192) target = $region32
      $region31: #{tpu_custom_call.1} parent=5 // pred_region
        %s196 = ssub.s32 %s16, 1
        // Predicated region
        $region33: #{tpu_custom_call.1} parent=31 // pred_check
          %p197 = pneg %p49
        $region34: #{tpu_custom_call.1} parent=31 // pred_check_branch
          %199 = sbr.rel (%p197) target = $region36
        $region35: #{tpu_custom_call.1} parent=31 // pred_region
          %200 = dma.done [#allocation4], 128
        $region36: #{tpu_custom_call.1} parent=31 // pred_fallthru
          _
        %s201 = sand.u32 %s64, 1
        %s202 = scalar_lea.sflag [#allocation7], %s201
        %s203 = sand.u32 %s64, 1
        %s204 = smul.addr %s203, 64
        %s205 = scalar_lea.vmem [#allocation6], %s204
        // Predicated region
        $region37: #{tpu_custom_call.1} parent=31 // pred_check
          %p206 = pneg %p77
        $region38: #{tpu_custom_call.1} parent=31 // pred_check_branch
          %208 = sbr.rel (%p206) target = $region40
        $region39: #{tpu_custom_call.1} parent=31 // pred_region
          %209 = dma.done %s202, 1024
        $region40: #{tpu_custom_call.1} parent=31 // pred_fallthru
          _
        %p210 = pneg %p49
        %p211 = pneg %p46
        %s212 = sand.u32 %s64, 1
        %s213 = scalar_lea.sflag [#allocation7], %s212
        %s214 = sand.u32 %s64, 1
        %s215 = smul.addr %s214, 64
        %s216 = scalar_lea.vmem [#allocation6], %s215
        %p217 = pneg %p77
        %p218 = pneg %p74
        %p219 = scmp.lt.s32.totalorder %s26, 0
        %s220 = scalar_select %p219, %s26, 0
        %s221 = smul.addr %s220, 4
        %s222 = scalar_lea.vmem %s2, %s221
        %p223 = pneg %p103
        %p224 = pneg %p100
        %p225 = pneg %p131
        %p226 = pneg %p128
        %s227 = sand.u32 %s118, 1
        %s228 = scalar_lea.sflag [#allocation5], %s227
        %s229 = sand.u32 %s118, 1
        %s230 = smul.addr %s229, 8
        %s231 = scalar_lea.vmem [#allocation8], %s230
        %p232 = scmp.lt.s32.totalorder %s26, 0
        %s233 = scalar_select %p232, %s26, 0
        %s234 = smul.addr %s233, 4
        %s235 = scalar_lea.vmem %s2, %s234
        %s236 = smul.u32 %s26, %s25
        %s238 = smul.u32 %s26, 128
        %p239 = scmp.eq.s32.totalorder %s25, 0
        // Predicated region
        $region41: #{tpu_custom_call.1} parent=31 // pred_check
          %p240 = pneg %p239
        $region42: #{tpu_custom_call.1} parent=31 // pred_check_branch
          %242 = sbr.rel (%p240) target = $region44
        $region43: #{tpu_custom_call.1} parent=31 // pred_region
          %v243 = vld [vmem:[#allocation3] sm:$0xff]
          %v244 = vpack.c.bf16 %v243, %v243
          %v245 = vld [vmem:[%s205] sm:$0xf]
          %v246 = vld [vmem:[%s205 + $0x4] sm:$0xf]
          %v247 = vld [vmem:[%s205 + $0x8] sm:$0xf]
          %v248 = vld [vmem:[%s205 + $0xc] sm:$0xf]
          %v249 = vld [vmem:[%s205 + $0x10] sm:$0xf]
          %v250 = vld [vmem:[%s205 + $0x14] sm:$0xf]
          %v251 = vld [vmem:[%s205 + $0x18] sm:$0xf]
          %v252 = vld [vmem:[%s205 + $0x1c] sm:$0xf]
          %v253 = vld [vmem:[%s205 + $0x20] sm:$0xf]
          %v254 = vld [vmem:[%s205 + $0x24] sm:$0xf]
          %v255 = vld [vmem:[%s205 + $0x28] sm:$0xf]
          %v256 = vld [vmem:[%s205 + $0x2c] sm:$0xf]
          %v257 = vld [vmem:[%s205 + $0x30] sm:$0xf]
          %v258 = vld [vmem:[%s205 + $0x34] sm:$0xf]
          %v259 = vld [vmem:[%s205 + $0x38] sm:$0xf]
          %v260 = vld [vmem:[%s205 + $0x3c] sm:$0xf]
          %v277 = vunpack.c.l.b16 %v245
          %v278 = vunpack.c.l.b16 %v246
          %v279 = vunpack.c.l.b16 %v247
          %v280 = vunpack.c.l.b16 %v248
          %v281 = vunpack.c.l.b16 %v249
          %v282 = vunpack.c.l.b16 %v250
          %v283 = vunpack.c.l.b16 %v251
          %v284 = vunpack.c.l.b16 %v252
          %v285 = vunpack.c.l.b16 %v253
          %v286 = vunpack.c.l.b16 %v254
          %v287 = vunpack.c.l.b16 %v255
          %v288 = vunpack.c.l.b16 %v256
          %v289 = vunpack.c.l.b16 %v257
          %v290 = vunpack.c.l.b16 %v258
          %v291 = vunpack.c.l.b16 %v259
          %v292 = vunpack.c.l.b16 %v260
          %v293 = vpack.c.b16 %v278, %v277
          %v294 = vpack.c.b16 %v280, %v279
          %v295 = vpack.c.b16 %v282, %v281
          %v296 = vpack.c.b16 %v284, %v283
          %v297 = vpack.c.b16 %v286, %v285
          %v298 = vpack.c.b16 %v288, %v287
          %v299 = vpack.c.b16 %v290, %v289
          %v300 = vpack.c.b16 %v292, %v291
          %309 = vmatprep.subr.bf16.mxu0 0
          %310 = vmatpush1.bf16.msra.mxu0 %v293
          %311 = vmatprep.subr.bf16.mxu0 0
          %312 = vmatpush1.bf16.msra.mxu0 %v294
          %313 = vmatprep.subr.bf16.mxu0 0
          %314 = vmatpush1.bf16.msra.mxu0 %v295
          %315 = vmatprep.subr.bf16.mxu0 0
          %316 = vmatpush1.bf16.msra.mxu0 %v296
          %317 = vmatprep.subr.bf16.mxu0 0
          %318 = vmatpush1.bf16.msra.mxu0 %v297
          %319 = vmatprep.subr.bf16.mxu0 0
          %320 = vmatpush1.bf16.msra.mxu0 %v298
          %321 = vmatprep.subr.bf16.mxu0 0
          %322 = vmatpush1.bf16.msra.mxu0 %v299
          %323 = vmatprep.subr.bf16.mxu0 0
          %324 = vmatpush1.bf16.msra.mxu0 %v300
          %325 = vmatprep.subr.bf16.mxu0 0
          %326 = vmatpush1.bf16.msra.mxu0 0
          %327 = vmatprep.subr.bf16.mxu0 0
          %328 = vmatpush1.bf16.msra.mxu0 0
          %329 = vmatprep.subr.bf16.mxu0 0
          %330 = vmatpush1.bf16.msra.mxu0 0
          %331 = vmatprep.subr.bf16.mxu0 0
          %332 = vmatpush1.bf16.msra.mxu0 0
          %333 = vmatprep.subr.bf16.mxu0 0
          %334 = vmatpush1.bf16.msra.mxu0 0
          %335 = vmatprep.subr.bf16.mxu0 0
          %336 = vmatpush1.bf16.msra.mxu0 0
          %337 = vmatprep.subr.bf16.mxu0 0
          %338 = vmatpush1.bf16.msra.mxu0 0
          %339 = vmatprep.subr.bf16.mxu0 0
          %340 = vmatpush1.bf16.msra.mxu0 0
          %341 = vmatprep.mubr.bf16.mxu0 0
          %342 = vmatmul.mubr.bf16.gmra.mrb[0].mxu0 %v244
          %v343 = vpop.f32.mrb[0].mxu0
          %v344 = vadd.f32 0.0, %v343
          %v345 = vpop.f32.mrb[0].mxu0
          %v346 = vpop.f32.mrb[0].mxu0
          %v347 = vpop.f32.mrb[0].mxu0
          %348 = vdwg.mxu0
          %v349 = vld [vmem:[%s235] sm:$0x1]
          %v350 = vld [vmem:[%s235 + $0x1] sm:$0x1]
          %v351 = vrot.slane %v344, 4
          %v352 = vadd.f32 %v344, %v351
          %v353 = vrot.slane %v352, 2
          %v354 = vadd.f32 %v352, %v353
          %v355 = vrot.slane %v354, 1
          %v356 = vadd.f32 %v354, %v355
          %v357 = vrcp.pop 8.0
          %v358 = vmul.f32 %v356, %v357
          %v359 = vsub.f32 %v344, %v358
          %v360 = vmul.f32 %v359, %v359
          %v361 = vrot.slane %v360, 4
          %v362 = vadd.f32 %v360, %v361
          %v363 = vrot.slane %v362, 2
          %v364 = vadd.f32 %v362, %v363
          %v365 = vrot.slane %v364, 1
          %v366 = vadd.f32 %v364, %v365
          %v367 = vmul.f32 %v366, %v357
          %v368 = vadd.f32 %v367, 1e-05
          %v369 = vrsqrt.pop %v368
          %v370 = vmul.f32 %v349, %v369
          %v371 = vlaneseq
          %v372 = vshrl.u32 %v371, 7
          %v373 = vsub.s32 0, %v372
          %v374 = vrot.slane %v370, %v373
          %v375 = vmul.f32 %v359, %v374
          %v376 = vlaneseq
          %v377 = vshrl.u32 %v376, 7
          %v378 = vsub.s32 0, %v377
          %v379 = vrot.slane %v350, %v378
          %v380 = vadd.f32 %v375, %v379
          %v381 = vmax.f32 %v380, 0.0
          %v382 = vpack.c.bf16 %v381, %v381
          %s383 = sshra.s32 %s238, 7
          %s384 = sand.u32 %s238, 127
          %s385 = smul.addr %s383, 4
          %s386 = scalar_lea.vmem [#allocation2], %s385
          %387 = vst [vmem:[%s386] sm:$0xf] %v382
        $region44: #{tpu_custom_call.1} parent=31 // pred_fallthru
          _
        %p388 = scmp.eq.s32.totalorder %s25, 1
        // Predicated region
        $region45: #{tpu_custom_call.1} parent=31 // pred_check
          %p389 = pneg %p388
        $region46: #{tpu_custom_call.1} parent=31 // pred_check_branch
          %391 = sbr.rel (%p389) target = $region48
        $region47: #{tpu_custom_call.1} parent=31 // pred_region
          %v392 = vld [vmem:[#allocation2] sm:$0xf]
          %v393 = vld [vmem:[%s205] sm:$0xf]
          %v394 = vld [vmem:[%s205 + $0x4] sm:$0xf]
          %v395 = vld [vmem:[%s205 + $0x8] sm:$0xf]
          %v396 = vld [vmem:[%s205 + $0xc] sm:$0xf]
          %v397 = vld [vmem:[%s205 + $0x10] sm:$0xf]
          %v398 = vld [vmem:[%s205 + $0x14] sm:$0xf]
          %v399 = vld [vmem:[%s205 + $0x18] sm:$0xf]
          %v400 = vld [vmem:[%s205 + $0x1c] sm:$0xf]
          %v401 = vld [vmem:[%s205 + $0x20] sm:$0xf]
          %v402 = vld [vmem:[%s205 + $0x24] sm:$0xf]
          %v403 = vld [vmem:[%s205 + $0x28] sm:$0xf]
          %v404 = vld [vmem:[%s205 + $0x2c] sm:$0xf]
          %v405 = vld [vmem:[%s205 + $0x30] sm:$0xf]
          %v406 = vld [vmem:[%s205 + $0x34] sm:$0xf]
          %v407 = vld [vmem:[%s205 + $0x38] sm:$0xf]
          %v408 = vld [vmem:[%s205 + $0x3c] sm:$0xf]
          %v425 = vunpack.c.l.b16 %v393
          %v426 = vunpack.c.l.b16 %v394
          %v427 = vunpack.c.l.b16 %v395
          %v428 = vunpack.c.l.b16 %v396
          %v429 = vunpack.c.l.b16 %v397
          %v430 = vunpack.c.l.b16 %v398
          %v431 = vunpack.c.l.b16 %v399
          %v432 = vunpack.c.l.b16 %v400
          %v433 = vunpack.c.l.b16 %v401
          %v434 = vunpack.c.l.b16 %v402
          %v435 = vunpack.c.l.b16 %v403
          %v436 = vunpack.c.l.b16 %v404
          %v437 = vunpack.c.l.b16 %v405
          %v438 = vunpack.c.l.b16 %v406
          %v439 = vunpack.c.l.b16 %v407
          %v440 = vunpack.c.l.b16 %v408
          %v441 = vpack.c.b16 %v426, %v425
          %v442 = vpack.c.b16 %v428, %v427
          %v443 = vpack.c.b16 %v430, %v429
          %v444 = vpack.c.b16 %v432, %v431
          %v445 = vpack.c.b16 %v434, %v433
          %v446 = vpack.c.b16 %v436, %v435
          %v447 = vpack.c.b16 %v438, %v437
          %v448 = vpack.c.b16 %v440, %v439
          %457 = vmatprep.subr.bf16.mxu0 0
          %458 = vmatpush1.bf16.msra.mxu0 %v441
          %459 = vmatprep.subr.bf16.mxu0 0
          %460 = vmatpush1.bf16.msra.mxu0 %v442
          %461 = vmatprep.subr.bf16.mxu0 0
          %462 = vmatpush1.bf16.msra.mxu0 %v443
          %463 = vmatprep.subr.bf16.mxu0 0
          %464 = vmatpush1.bf16.msra.mxu0 %v444
          %465 = vmatprep.subr.bf16.mxu0 0
          %466 = vmatpush1.bf16.msra.mxu0 %v445
          %467 = vmatprep.subr.bf16.mxu0 0
          %468 = vmatpush1.bf16.msra.mxu0 %v446
          %469 = vmatprep.subr.bf16.mxu0 0
          %470 = vmatpush1.bf16.msra.mxu0 %v447
          %471 = vmatprep.subr.bf16.mxu0 0
          %472 = vmatpush1.bf16.msra.mxu0 %v448
          %473 = vmatprep.subr.bf16.mxu0 0
          %474 = vmatpush1.bf16.msra.mxu0 0
          %475 = vmatprep.subr.bf16.mxu0 0
          %476 = vmatpush1.bf16.msra.mxu0 0
          %477 = vmatprep.subr.bf16.mxu0 0
          %478 = vmatpush1.bf16.msra.mxu0 0
          %479 = vmatprep.subr.bf16.mxu0 0
          %480 = vmatpush1.bf16.msra.mxu0 0
          %481 = vmatprep.subr.bf16.mxu0 0
          %482 = vmatpush1.bf16.msra.mxu0 0
          %483 = vmatprep.subr.bf16.mxu0 0
          %484 = vmatpush1.bf16.msra.mxu0 0
          %485 = vmatprep.subr.bf16.mxu0 0
          %486 = vmatpush1.bf16.msra.mxu0 0
          %487 = vmatprep.subr.bf16.mxu0 0
          %488 = vmatpush1.bf16.msra.mxu0 0
          %489 = vmatprep.mubr.bf16.mxu0 0
          %490 = vmatmul.mubr.bf16.gmra.mrb[0].mxu0 %v392
          %v491 = vpop.f32.mrb[0].mxu0
          %v492 = vadd.f32 0.0, %v491
          %v493 = vpop.f32.mrb[0].mxu0
          %v494 = vpop.f32.mrb[0].mxu0
          %v495 = vpop.f32.mrb[0].mxu0
          %496 = vdwg.mxu0
          %v497 = vld [vmem:[%s235 + $0x2] sm:$0x1]
          %v498 = vld [vmem:[%s235 + $0x3] sm:$0x1]
          %v499 = vrot.slane %v492, 4
          %v500 = vadd.f32 %v492, %v499
          %v501 = vrot.slane %v500, 2
          %v502 = vadd.f32 %v500, %v501
          %v503 = vrot.slane %v502, 1
          %v504 = vadd.f32 %v502, %v503
          %v505 = vrcp.pop 8.0
          %v506 = vmul.f32 %v504, %v505
          %v507 = vsub.f32 %v492, %v506
          %v508 = vmul.f32 %v507, %v507
          %v509 = vrot.slane %v508, 4
          %v510 = vadd.f32 %v508, %v509
          %v511 = vrot.slane %v510, 2
          %v512 = vadd.f32 %v510, %v511
          %v513 = vrot.slane %v512, 1
          %v514 = vadd.f32 %v512, %v513
          %v515 = vmul.f32 %v514, %v505
          %v516 = vadd.f32 %v515, 1e-05
          %v517 = vrsqrt.pop %v516
          %v518 = vmul.f32 %v497, %v517
          %v519 = vlaneseq
          %v520 = vshrl.u32 %v519, 7
          %v521 = vsub.s32 0, %v520
          %v522 = vrot.slane %v518, %v521
          %v523 = vmul.f32 %v507, %v522
          %v524 = vlaneseq
          %v525 = vshrl.u32 %v524, 7
          %v526 = vsub.s32 0, %v525
          %v527 = vrot.slane %v498, %v526
          %v528 = vadd.f32 %v523, %v527
          %s529 = sshra.s32 %s238, 7
          %s530 = sand.u32 %s238, 127
          %s531 = scalar_lea.vmem [#allocation3], %s529
          %v532 = vld [vmem:[%s531] sm:$0xff]
          %v533 = vadd.f32 %v528, %v532
          %v534 = vmax.f32 %v533, 0.0
          %535 = vst [vmem:[%s231] sm:$0xff] %v534
        $region48: #{tpu_custom_call.1} parent=31 // pred_fallthru
          _
        %s536 = sand.u32 %s118, 1
        %s537 = scalar_lea.sflag [#allocation5], %s536
        %s538 = sand.u32 %s118, 1
        %s539 = smul.addr %s538, 8
        %s540 = scalar_lea.vmem [#allocation8], %s539
        // Predicated region
        $region49: #{tpu_custom_call.1} parent=31 // pred_check
          %p541 = pneg %p128
        $region50: #{tpu_custom_call.1} parent=31 // pred_check_branch
          %543 = sbr.rel (%p541) target = $region52
        $region51: #{tpu_custom_call.1} parent=31 // pred_region
          %s544 = smul.u32 %s26, %s25
          %s546 = ssub.s32 128, 128
          %547 = vsyncadd %s537, %s546
          %s548 = smul.addr %s544, 128
          %s549 = scalar_lea.hbm %s3, %s548
          %s551 = sshll.u32 %s540, 4
          %s552 = int_to_ptr.vmem [resolvable:$true] %s551
          %554 = dma.vmem_to_hbm [thread:$0]  %s552, 128, %s549, %s537
        $region52: #{tpu_custom_call.1} parent=31 // pred_fallthru
          _
      $region32: #{tpu_custom_call.1} parent=5 // pred_fallthru
        _
      %p555 = scmp.le.s32.totalorder 2, %s16
      // Predicated region
      $region53: #{tpu_custom_call.1} parent=5 // pred_check
        %p556 = pneg %p555
      $region54: #{tpu_custom_call.1} parent=5 // pred_check_branch
        %558 = sbr.rel (%p556) target = $region56
      $region55: #{tpu_custom_call.1} parent=5 // pred_region
        %s559 = ssub.s32 %s16, 2
        // Predicated region
        $region57: #{tpu_custom_call.1} parent=55 // pred_check
          %p560 = pneg %p134
        $region58: #{tpu_custom_call.1} parent=55 // pred_check_branch
          %562 = sbr.rel (%p560) target = $region60
        $region59: #{tpu_custom_call.1} parent=55 // pred_region
          %s563 = sand.u32 %s119, 1
          %s564 = scalar_lea.sflag [#allocation5], %s563
          %s565 = sand.u32 %s119, 1
          %s566 = smul.addr %s565, 8
          %s567 = scalar_lea.vmem [#allocation8], %s566
          %568 = dma.done %s564, 128
        $region60: #{tpu_custom_call.1} parent=55 // pred_fallthru
          _
      $region56: #{tpu_custom_call.1} parent=5 // pred_fallthru
        _
    $region6: #{tpu_custom_call.1} parent=1 // loop_footer
      %s20 = sadd.s32 1, %s16
    $region7: #{tpu_custom_call.1} parent=1 // loop_footer_branch
      %15 = sbr.rel target = $region3
    $region8: #{tpu_custom_call.1} parent=1 // loop_exit
      _
    %569 = vsyncpa [#allocation4], 1
    %s570 = scalar_lea.sflag [#allocation4], 1
    %571 = vsyncpa %s570, 1
    %572 = vsyncpa [#allocation7], 1
    %s573 = scalar_lea.sflag [#allocation7], 1
    %574 = vsyncpa %s573, 1
    %575 = vsyncpa [#allocation5], 1
    %s576 = scalar_lea.sflag [#allocation5], 1
    %577 = vsyncpa %s576, 1

</llo_original>
